<compile_context>
chip_gen: v7x
topology: tpu7x:2x2x1
jax: 0.10.0
libtpu: 0.0.40
codegen_flags: <defaults>
</compile_context>

<pallas_src>
import jax
import jax.numpy as jnp
from jax.experimental import pallas as pl
from jax.experimental.pallas import tpu as pltpu


def gcn_kernel(xt_ref, w1_ref, bdw2_ref, b2_ref, o_ref):
    # xt_ref:   (N, B*S)     x transposed: xt[n, b*S+s] = x[b, s, n]
    # w1_ref:   (N, N)       W1 - I        (conv1 weight with residual folded in)
    # bdw2_ref: (B*S, B*S)   kron(I_B, W2^T)  (conv2 applied to all batches at once)
    # b2_ref:   (N, B*S)     b1 (outer) rowsum(W2), tiled over batch (folded bias)
    # o_ref:    (N, B*S)     transposed output
    ht = jnp.dot(w1_ref[...], xt_ref[...],
                 preferred_element_type=jnp.float32)            # (N, B*S) conv1 + residual
    ot = jnp.dot(ht, bdw2_ref[...],
                 preferred_element_type=jnp.float32) + b2_ref[...]  # conv2 + folded bias
    o_ref[...] = jnp.maximum(ot, 0.0).astype(o_ref.dtype)       # single lane-dense slab store


def prepare_gcn_params(w1, b1, w2, batch):
    """One-time parameter folding (do NOT call per forward).

    w1: (N, N) conv1 weight (Conv1d k=1 squeezed); b1: (N,) conv1 bias;
    w2: (S, S) conv2 weight; batch: B.
    """
    N = w1.shape[0]
    S = w2.shape[0]
    # Residual fold, transposed layout:  h^T = (W1 - I) @ x^T
    w1_fold_t = w1 - jnp.eye(N, dtype=w1.dtype)                       # (N, N)
    # Block-diagonal conv2 (transposed):  out^T = h^T @ kron(I_B, W2^T)
    bd_w2_t = jnp.kron(jnp.eye(batch, dtype=w2.dtype), w2.T)          # (B*S, B*S)
    # conv1 bias folded through conv2:  b2_t[n, b*S+s] = b1[n] * rowsum(W2)[s]
    b2_small_t = b1[:, None] * jnp.sum(w2, axis=1)[None, :]           # (N, S)
    b2_t = jnp.tile(b2_small_t, (1, batch))                           # (N, B*S)
    return w1_fold_t, bd_w2_t, b2_t


@jax.jit
def gcn_forward(x, w1_fold_t, bd_w2_t, b2_t):
    """x: (B, S, N) f32; folded params from prepare_gcn_params."""
    B, S, N = x.shape
    BS = B * S
    x_t = x.reshape(BS, N).T                                          # (N, B*S), lane axis = B*S

    bytes_in = (x_t.size + w1_fold_t.size + bd_w2_t.size + b2_t.size + BS * N) * 4
    cost = pl.CostEstimate(
        flops=2 * N * N * BS + 2 * N * BS * BS,
        transcendentals=0,
        bytes_accessed=bytes_in,
    )

    out_t = pl.pallas_call(
        gcn_kernel,
        out_shape=jax.ShapeDtypeStruct((N, BS), x.dtype),
        in_specs=[
            pl.BlockSpec(memory_space=pltpu.MemorySpace.VMEM),   # x^T (whole slab)
            pl.BlockSpec(memory_space=pltpu.MemorySpace.VMEM),   # W1 - I
            pl.BlockSpec(memory_space=pltpu.MemorySpace.VMEM),   # kron(I_B, W2^T)
            pl.BlockSpec(memory_space=pltpu.MemorySpace.VMEM),   # folded bias (transposed)
        ],
        out_specs=pl.BlockSpec(memory_space=pltpu.MemorySpace.VMEM),
        cost_estimate=cost,
    )(x_t, w1_fold_t, bd_w2_t, b2_t)

    return out_t.T.reshape(B, S, N)


def gcn_reference(x, w1, b1, w2):
    # Pure-JAX reference matching the PyTorch forward exactly.
    h = jnp.einsum("bsm,nm->bsn", x, w1) + b1[None, None, :]   # conv1 on permuted x
    h = h - x
    out = jnp.einsum("st,btn->bsn", w2, h)                     # conv2, bias=False
    return jnp.maximum(out, 0.0)


if __name__ == "__main__":
    B, num_state, num_node = 2, 32, 16   # x ~ (B, num_state, num_node)

    key = jax.random.PRNGKey(0)
    kx, kw1, kb1, kw2 = jax.random.split(key, 4)

    x = jax.random.normal(kx, (B, num_state, num_node), dtype=jnp.float32)
    # Synthetic parameters (shapes from nn.Conv1d with k=1):
    #   conv1.weight: (num_node, num_node, 1) -> (N, N); conv1.bias: (N,)
    #   conv2.weight: (num_state, num_state, 1) -> (S, S); no bias
    w1 = jax.random.normal(kw1, (num_node, num_node), dtype=jnp.float32) * 0.1
    b1 = jax.random.normal(kb1, (num_node,), dtype=jnp.float32) * 0.1
    w2 = jax.random.normal(kw2, (num_state, num_state), dtype=jnp.float32) * 0.1

    # One-time weight folding (hoisted out of the forward path).
    w1_fold_t, bd_w2_t, b2_t = prepare_gcn_params(w1, b1, w2, B)
    w1_fold_t, bd_w2_t, b2_t = jax.block_until_ready((w1_fold_t, bd_w2_t, b2_t))

    out = gcn_forward(x, w1_fold_t, bd_w2_t, b2_t)
    out = jax.block_until_ready(out)

    ref = gcn_reference(x, w1, b1, w2)
    assert out.shape == (B, num_state, num_node)
    assert jnp.allclose(out, ref, atol=1e-5, rtol=1e-5), "mismatch vs reference"

    print("KERNEL_OK")
</pallas_src>

<mosaic_0001>
module attributes {stable_mosaic.version = 11 : i64} {
  func.func @gcn_kernel(%arg0: memref<16x64xf32, #tpu.memory_space<vmem>>, %arg1: memref<16x16xf32, #tpu.memory_space<vmem>>, %arg2: memref<64x64xf32, #tpu.memory_space<vmem>>, %arg3: memref<16x64xf32, #tpu.memory_space<vmem>>, %arg4: memref<16x64xf32, #tpu.memory_space<vmem>>) attributes {dimension_semantics = [], scalar_prefetch = 0 : i64, scratch_operands = 0 : i64, tpu.core_type = #tpu.core_type<tc>} {
    %c0 = arith.constant 0 : index
    %c0_0 = arith.constant 0 : index
    %0 = vector.load %arg1[%c0, %c0_0] : memref<16x16xf32, #tpu.memory_space<vmem>>, vector<16x16xf32>
    %c0_1 = arith.constant 0 : index
    %c0_2 = arith.constant 0 : index
    %1 = vector.load %arg0[%c0_1, %c0_2] : memref<16x64xf32, #tpu.memory_space<vmem>>, vector<16x64xf32>
    %cst = arith.constant dense<0.000000e+00> : vector<16x64xf32>
    %2 = tpu.matmul %0, %1, %cst {dimension_numbers = #tpu.dot_dimension_numbers<[1], [0], [0], [1], [0, 0, 1, 1], [], []>} : vector<16x16xf32>, vector<16x64xf32>, vector<16x64xf32> -> vector<16x64xf32>
    %c0_3 = arith.constant 0 : index
    %c0_4 = arith.constant 0 : index
    %3 = vector.load %arg2[%c0_3, %c0_4] : memref<64x64xf32, #tpu.memory_space<vmem>>, vector<64x64xf32>
    %cst_5 = arith.constant dense<0.000000e+00> : vector<16x64xf32>
    %4 = tpu.matmul %2, %3, %cst_5 {dimension_numbers = #tpu.dot_dimension_numbers<[1], [0], [0], [1], [0, 0, 1, 1], [], []>} : vector<16x64xf32>, vector<64x64xf32>, vector<16x64xf32> -> vector<16x64xf32>
    %c0_6 = arith.constant 0 : index
    %c0_7 = arith.constant 0 : index
    %5 = vector.load %arg3[%c0_6, %c0_7] : memref<16x64xf32, #tpu.memory_space<vmem>>, vector<16x64xf32>
    %6 = arith.addf %4, %5 : vector<16x64xf32>
    %cst_8 = arith.constant 0.000000e+00 : f32
    %7 = vector.broadcast %cst_8 : f32 to vector<16x64xf32>
    %8 = arith.maximumf %6, %7 : vector<16x64xf32>
    %c0_9 = arith.constant 0 : index
    %c0_10 = arith.constant 0 : index
    %9 = vector.load %arg4[%c0_9, %c0_10] : memref<16x64xf32, #tpu.memory_space<vmem>>, vector<16x64xf32>
    tpu.vector_store %arg4[%c0_9, %c0_10], %8 {strides = array<i32>} : memref<16x64xf32, #tpu.memory_space<vmem>>, vector<16x64xf32>,
    return
  }
}

</mosaic_0001>

<llo_original>
// kernel: gcn_forward.1
$region0: #{gcn_forward.1}
  #allocation0 [shape = 'u32[]', space=smem, size = 0x4, offset = 0x4, fixed_abs, tag = 'smem constant byte address 0x4 - core index']
  #allocation1 [shape = 'u32[144,128]{1,0:T(1,128)}', space=vmem, size = 0x12000, scoped, tag = 'internal scratch']
  %s0 = inlined_call_operand.vmem [shape: f32[16,64], index: 0, kind: input, shape index: {}]
  %s1 = inlined_call_operand.vmem [shape: f32[16,16], index: 1, kind: input, shape index: {}]
  %s2 = inlined_call_operand.vmem [shape: f32[64,64], index: 2, kind: input, shape index: {}]
  %s3 = inlined_call_operand.vmem [shape: f32[16,64], index: 3, kind: input, shape index: {}]
  %s4 = inlined_call_operand.vmem [shape: f32[16,64], index: 4, kind: output, shape index: {}]
  %s5 = sld [smem:[#allocation0]]
  $region26: #{gcn_forward.1} parent=0
    _
  %s7 = ssub.s32 1, %s5
  %s8 = scalar_select 0, %s7, %s5
  // Predicated region
  $region2: #{gcn_forward.1} parent=0 // pred_check
    _
  $region3: #{gcn_forward.1} parent=0 // pred_check_branch
    %10 = sbr.rel (0) target = $region5
  $region4: #{gcn_forward.1} parent=0 // pred_region
    _
  $region5: #{gcn_forward.1} parent=0 // pred_fallthru
    _
  // Predicated region
  $region6: #{gcn_forward.1} parent=0 // pred_check
    _
  $region7: #{gcn_forward.1} parent=0 // pred_check_branch
    %12 = sbr.rel (0) target = $region9
  $region8: #{gcn_forward.1} parent=0 // pred_region
    _
  $region9: #{gcn_forward.1} parent=0 // pred_fallthru
    _
  // Predicated region
  $region10: #{gcn_forward.1} parent=0 // pred_check
    _
  $region11: #{gcn_forward.1} parent=0 // pred_check_branch
    %14 = sbr.rel (0) target = $region13
  $region12: #{gcn_forward.1} parent=0 // pred_region
    _
  $region13: #{gcn_forward.1} parent=0 // pred_fallthru
    _
  // Predicated region
  $region14: #{gcn_forward.1} parent=0 // pred_check
    _
  $region15: #{gcn_forward.1} parent=0 // pred_check_branch
    %16 = sbr.rel (0) target = $region17
  $region16: #{gcn_forward.1} parent=0 // pred_region
    _
  $region17: #{gcn_forward.1} parent=0 // pred_fallthru
    _
  %v17 = vld [vmem:[%s1] sm:$0xff]
  %v18 = vld [vmem:[%s1 + $0x8] sm:$0xff]
  %v19 = vld [vmem:[%s0] sm:$0xff]
  %v20 = vld [vmem:[%s0 + $0x8] sm:$0xff]
  %vm21 = vcmask 130048
  %v23 = vsel %vm21, %v17, 0
  %v26 = vsel %vm21, %v18, 0
  %28 = vmatprep.subr.mxu0 0.0
  %29 = vmatpush1.msra.mxu0 %v19
  %30 = vmatprep.subr.mxu0 0.0
  %31 = vmatpush1.msra.mxu0 %v20
  %32 = vmatprep.subr.mxu0 0.0
  %33 = vmatpush1.msra.mxu0 0.0
  %34 = vmatprep.subr.mxu0 0.0
  %35 = vmatpush1.msra.mxu0 0.0
  %36 = vmatprep.subr.mxu0 0.0
  %37 = vmatpush1.msra.mxu0 0.0
  %38 = vmatprep.subr.mxu0 0.0
  %39 = vmatpush1.msra.mxu0 0.0
  %40 = vmatprep.subr.mxu0 0.0
  %41 = vmatpush1.msra.mxu0 0.0
  %42 = vmatprep.subr.mxu0 0.0
  %43 = vmatpush1.msra.mxu0 0.0
  %44 = vmatprep.subr.mxu0 0.0
  %45 = vmatpush1.msra.mxu0 0.0
  %46 = vmatprep.subr.mxu0 0.0
  %47 = vmatpush1.msra.mxu0 0.0
  %48 = vmatprep.subr.mxu0 0.0
  %49 = vmatpush1.msra.mxu0 0.0
  %50 = vmatprep.subr.mxu0 0.0
  %51 = vmatpush1.msra.mxu0 0.0
  %52 = vmatprep.subr.mxu0 0.0
  %53 = vmatpush1.msra.mxu0 0.0
  %54 = vmatprep.subr.mxu0 0.0
  %55 = vmatpush1.msra.mxu0 0.0
  %56 = vmatprep.subr.mxu0 0.0
  %57 = vmatpush1.msra.mxu0 0.0
  %58 = vmatprep.subr.mxu0 0.0
  %59 = vmatpush1.msra.mxu0 0.0
  %60 = vmatprep.subr.mxu0 0.0
  %61 = vmatpush1.msra.mxu0 0.0
  %62 = vmatprep.subr.mxu0 0.0
  %63 = vmatpush1.msra.mxu0 0.0
  %64 = vmatprep.subr.mxu0 0.0
  %65 = vmatpush1.msra.mxu0 0.0
  %66 = vmatprep.subr.mxu0 0.0
  %67 = vmatpush1.msra.mxu0 0.0
  %68 = vmatprep.subr.mxu0 0.0
  %69 = vmatpush1.msra.mxu0 0.0
  %70 = vmatprep.subr.mxu0 0.0
  %71 = vmatpush1.msra.mxu0 0.0
  %72 = vmatprep.subr.mxu0 0.0
  %73 = vmatpush1.msra.mxu0 0.0
  %74 = vmatprep.subr.mxu0 0.0
  %75 = vmatpush1.msra.mxu0 0.0
  %76 = vmatprep.subr.mxu0 0.0
  %77 = vmatpush1.msra.mxu0 0.0
  %78 = vmatprep.subr.mxu0 0.0
  %79 = vmatpush1.msra.mxu0 0.0
  %80 = vmatprep.subr.mxu0 0.0
  %81 = vmatpush1.msra.mxu0 0.0
  %82 = vmatprep.subr.mxu0 0.0
  %83 = vmatpush1.msra.mxu0 0.0
  %84 = vmatprep.subr.mxu0 0.0
  %85 = vmatpush1.msra.mxu0 0.0
  %86 = vmatprep.subr.mxu0 0.0
  %87 = vmatpush1.msra.mxu0 0.0
  %88 = vmatprep.subr.mxu0 0.0
  %89 = vmatpush1.msra.mxu0 0.0
  %90 = vmatprep.subr.mxu0 0.0
  %91 = vmatpush1.msra.mxu0 0.0
  %92 = vmatprep.mubr.f32.mxu0 0.0
  %93 = vmatmul.mubr.f32.gmra.mrb[0].mxu0 %v23
  %v94 = vpop.f32.mrb[0].mxu0
  %v95 = vadd.f32 0.0, %v94
  %v96 = vpop.f32.mrb[0].mxu0
  %97 = vmatprep.mubr.f32.mxu0 0.0
  %98 = vmatmul.mubr.f32.gmra.mrb[0].mxu0 %v26
  %v99 = vpop.f32.mrb[0].mxu0
  %v100 = vadd.f32 0.0, %v99
  %v101 = vpop.f32.mrb[0].mxu0
  %102 = vdwg.mxu0
  %v103 = vld [vmem:[%s2] sm:$0xff]
  %v104 = vld [vmem:[%s2 + $0x8] sm:$0xff]
  %v105 = vld [vmem:[%s2 + $0x10] sm:$0xff]
  %v106 = vld [vmem:[%s2 + $0x18] sm:$0xff]
  %v107 = vld [vmem:[%s2 + $0x20] sm:$0xff]
  %v108 = vld [vmem:[%s2 + $0x28] sm:$0xff]
  %v109 = vld [vmem:[%s2 + $0x30] sm:$0xff]
  %v110 = vld [vmem:[%s2 + $0x38] sm:$0xff]
  %v111 = vld [vmem:[%s3] sm:$0xff]
  %v112 = vld [vmem:[%s3 + $0x8] sm:$0xff]
  %vm113 = vcmask 523264
  %v115 = vsel %vm113, %v95, 0
  %v118 = vsel %vm113, %v100, 0
  %120 = vmatprep.subr.mxu0 0.0
  %121 = vmatpush1.msra.mxu0 %v103
  %122 = vmatprep.subr.mxu0 0.0
  %123 = vmatpush1.msra.mxu0 %v104
  %124 = vmatprep.subr.mxu0 0.0
  %125 = vmatpush1.msra.mxu0 %v105
  %126 = vmatprep.subr.mxu0 0.0
  %127 = vmatpush1.msra.mxu0 %v106
  %128 = vmatprep.subr.mxu0 0.0
  %129 = vmatpush1.msra.mxu0 %v107
  %130 = vmatprep.subr.mxu0 0.0
  %131 = vmatpush1.msra.mxu0 %v108
  %132 = vmatprep.subr.mxu0 0.0
  %133 = vmatpush1.msra.mxu0 %v109
  %134 = vmatprep.subr.mxu0 0.0
  %135 = vmatpush1.msra.mxu0 %v110
  %136 = vmatprep.subr.mxu0 0.0
  %137 = vmatpush1.msra.mxu0 0.0
  %138 = vmatprep.subr.mxu0 0.0
  %139 = vmatpush1.msra.mxu0 0.0
  %140 = vmatprep.subr.mxu0 0.0
  %141 = vmatpush1.msra.mxu0 0.0
  %142 = vmatprep.subr.mxu0 0.0
  %143 = vmatpush1.msra.mxu0 0.0
  %144 = vmatprep.subr.mxu0 0.0
  %145 = vmatpush1.msra.mxu0 0.0
  %146 = vmatprep.subr.mxu0 0.0
  %147 = vmatpush1.msra.mxu0 0.0
  %148 = vmatprep.subr.mxu0 0.0
  %149 = vmatpush1.msra.mxu0 0.0
  %150 = vmatprep.subr.mxu0 0.0
  %151 = vmatpush1.msra.mxu0 0.0
  %152 = vmatprep.subr.mxu0 0.0
  %153 = vmatpush1.msra.mxu0 0.0
  %154 = vmatprep.subr.mxu0 0.0
  %155 = vmatpush1.msra.mxu0 0.0
  %156 = vmatprep.subr.mxu0 0.0
  %157 = vmatpush1.msra.mxu0 0.0
  %158 = vmatprep.subr.mxu0 0.0
  %159 = vmatpush1.msra.mxu0 0.0
  %160 = vmatprep.subr.mxu0 0.0
  %161 = vmatpush1.msra.mxu0 0.0
  %162 = vmatprep.subr.mxu0 0.0
  %163 = vmatpush1.msra.mxu0 0.0
  %164 = vmatprep.subr.mxu0 0.0
  %165 = vmatpush1.msra.mxu0 0.0
  %166 = vmatprep.subr.mxu0 0.0
  %167 = vmatpush1.msra.mxu0 0.0
  %168 = vmatprep.subr.mxu0 0.0
  %169 = vmatpush1.msra.mxu0 0.0
  %170 = vmatprep.subr.mxu0 0.0
  %171 = vmatpush1.msra.mxu0 0.0
  %172 = vmatprep.subr.mxu0 0.0
  %173 = vmatpush1.msra.mxu0 0.0
  %174 = vmatprep.subr.mxu0 0.0
  %175 = vmatpush1.msra.mxu0 0.0
  %176 = vmatprep.subr.mxu0 0.0
  %177 = vmatpush1.msra.mxu0 0.0
  %178 = vmatprep.subr.mxu0 0.0
  %179 = vmatpush1.msra.mxu0 0.0
  %180 = vmatprep.subr.mxu0 0.0
  %181 = vmatpush1.msra.mxu0 0.0
  %182 = vmatprep.subr.mxu0 0.0
  %183 = vmatpush1.msra.mxu0 0.0
  %184 = vmatprep.mubr.f32.mxu0 0.0
  %185 = vmatmul.mubr.f32.gmra.mrb[0].mxu0 %v115
  %v186 = vpop.f32.mrb[0].mxu0
  %v187 = vadd.f32 %v111, %v186
  %v188 = vpop.f32.mrb[0].mxu0
  %189 = vmatprep.mubr.f32.mxu0 0.0
  %190 = vmatmul.mubr.f32.gmra.mrb[0].mxu0 %v118
  %v191 = vpop.f32.mrb[0].mxu0
  %v192 = vadd.f32 %v112, %v191
  %v193 = vpop.f32.mrb[0].mxu0
  %194 = vdwg.mxu0
  %v195 = vmax.f32 %v187, 0.0
  %v196 = vmax.f32 %v192, 0.0
  %197 = vst.msk [vmem:[%s4] sm:$0xff] %vm113, %v195
  %198 = vst.msk [vmem:[%s4 + $0x8] sm:$0xff] %vm113, %v196
  // Predicated region
  $region18: #{gcn_forward.1} parent=0 // pred_check
    _
  $region19: #{gcn_forward.1} parent=0 // pred_check_branch
    %200 = sbr.rel (0) target = $region21
  $region20: #{gcn_forward.1} parent=0 // pred_region
    _
  $region21: #{gcn_forward.1} parent=0 // pred_fallthru
    _
  // Predicated region
  $region22: #{gcn_forward.1} parent=0 // pred_check
    _
  $region23: #{gcn_forward.1} parent=0 // pred_check_branch
    %202 = sbr.rel (0) target = $region25
  $region24: #{gcn_forward.1} parent=0 // pred_region
    _
  $region25: #{gcn_forward.1} parent=0 // pred_fallthru
    _

</llo_original>
